<compile_context>
chip_gen: v5e
topology: v5e:2x2
jax: 0.10.0
libtpu: 0.0.40
codegen_flags: <defaults>
</compile_context>

<pallas_src>
import functools

import jax
import jax.numpy as jnp
from jax.experimental import pallas as pl
from jax.experimental.pallas import tpu as pltpu


def _gru_kernel(x_ref,            # (T*B, F)   time-major inputs, flattened
                wi_ref,           # (F, GP)    fused [Wir|Wiz|Win]^T, zero-padded to GP lanes
                wh_ref,           # (H, GP)    fused [Whr|Whz|Whn]^T, zero-padded
                bi_ref,           # (1, GP)    b_ih fused [b_ir|b_iz|b_in], zero-padded
                bh_ref,           # (1, GP)    b_hh fused [b_hr|b_hz|b_hn], zero-padded
                wo_ref,           # (H, O)
                bo_ref,           # (1, O)
                out_ref,          # (B, O)
                *, T, B, H):
    # --- hoisted input projection: ALL timesteps in one MXU-friendly matmul ---
    gi_all = (jnp.dot(x_ref[...], wi_ref[...],
                      preferred_element_type=jnp.float32)
              + bi_ref[...])                       # (T*B, GP)

    wh = wh_ref[...]                               # keep resident across steps
    bh = bh_ref[...]

    h = jnp.zeros((B, H), jnp.float32)             # hidden state as a carried value

    # --- serial recurrence: only h @ W_h on the critical path (T is static) ---
    for t in range(T):
        gi = gi_all[t * B:(t + 1) * B]             # (B, GP), static sublane-aligned slice
        gh = jnp.dot(h, wh, preferred_element_type=jnp.float32) + bh   # (B, GP)

        # PyTorch GRU cell (gate order r, z, n; note b_hn stays inside the r*(.) term):
        #   r  = sigmoid(x Wir^T + b_ir + h Whr^T + b_hr)
        #   z  = sigmoid(x Wiz^T + b_iz + h Whz^T + b_hz)
        #   n  = tanh  (x Win^T + b_in + r * (h Whn^T + b_hn))
        #   h' = (1 - z) * n + z * h
        r = jax.nn.sigmoid(gi[:, 0:H] + gh[:, 0:H])
        z = jax.nn.sigmoid(gi[:, H:2 * H] + gh[:, H:2 * H])
        n = jnp.tanh(gi[:, 2 * H:3 * H] + r * gh[:, 2 * H:3 * H])
        h = (1.0 - z) * n + z * h

    # --- fused final Linear on the last hidden state ---
    out_ref[...] = (jnp.dot(h, wo_ref[...], preferred_element_type=jnp.float32)
                    + bo_ref[...]).astype(out_ref.dtype)


def custom_gru_forward(x, params):
    """x: (B, T, F) batch-first (PyTorch convention).  Returns (B, O)."""
    B, T, F = x.shape
    H = params["w_hh"].shape[1]            # w_hh: (3H, H), PyTorch layout [r, z, n]
    O = params["w_out"].shape[0]
    GP = ((3 * H + 127) // 128) * 128      # gate dim padded to a multiple of 128 lanes

    # --- glue: fuse + pad parameters into kernel-friendly layouts ---
    w_ih = params["w_ih"]                  # (3H, F)
    w_hh = params["w_hh"]                  # (3H, H)
    b_ih = params["b_ih"]                  # (3H,)
    b_hh = params["b_hh"]                  # (3H,)

    wi = jnp.zeros((F, GP), jnp.float32).at[:, :3 * H].set(w_ih.T)   # (F, GP)
    wh = jnp.zeros((H, GP), jnp.float32).at[:, :3 * H].set(w_hh.T)   # (H, GP)
    bi = jnp.zeros((1, GP), jnp.float32).at[:, :3 * H].set(b_ih)
    bh = jnp.zeros((1, GP), jnp.float32).at[:, :3 * H].set(b_hh)
    wo = params["w_out"].T                                           # (H, O)
    bo = params["b_out"].reshape(1, O)

    # time-major, flattened to (T*B, F) so the input projection is one matmul
    x_flat = jnp.transpose(x, (1, 0, 2)).reshape(T * B, F)

    # every operand's block == full array shape -> single resident VMEM tile each
    full = lambda shape: pl.BlockSpec(shape, lambda i: tuple(0 for _ in shape))

    kernel = functools.partial(_gru_kernel, T=T, B=B, H=H)

    return pl.pallas_call(
        kernel,
        out_shape=jax.ShapeDtypeStruct((B, O), jnp.float32),
        grid=(1,),                                 # single invocation; recurrence is in-kernel
        in_specs=[
            full((T * B, F)),                      # x
            full((F, GP)), full((H, GP)),          # fused W_i, W_h
            full((1, GP)), full((1, GP)),          # fused b_ih, b_hh
            full((H, O)), full((1, O)),            # w_out, b_out
        ],
        out_specs=full((B, O)),
        compiler_params=pltpu.CompilerParams(
            dimension_semantics=("arbitrary",)),
    )(x_flat, wi, wh, bi, bh, wo, bo)


def reference_forward(x, params):
    """Pure-JAX reference of the PyTorch forward (GRU + Linear on last step)."""
    B, T, F = x.shape
    H = params["w_hh"].shape[1]
    w_ih, w_hh = params["w_ih"], params["w_hh"]
    b_ih, b_hh = params["b_ih"], params["b_hh"]

    def step(h, x_t):
        gi = x_t @ w_ih.T + b_ih
        gh = h @ w_hh.T + b_hh
        r = jax.nn.sigmoid(gi[:, :H] + gh[:, :H])
        z = jax.nn.sigmoid(gi[:, H:2 * H] + gh[:, H:2 * H])
        n = jnp.tanh(gi[:, 2 * H:] + r * gh[:, 2 * H:])
        h_new = (1.0 - z) * n + z * h
        return h_new, None

    h0 = jnp.zeros((B, H), jnp.float32)
    h_last, _ = jax.lax.scan(step, h0, jnp.transpose(x, (1, 0, 2)))
    return h_last @ params["w_out"].T + params["b_out"]


def init_params(key, input_size, hidden_size, n_output):
    """Deterministic init mirroring PyTorch GRU/Linear uniform(-1/sqrt(H), 1/sqrt(H))."""
    ks = jax.random.split(key, 6)
    s = 1.0 / jnp.sqrt(hidden_size)
    u = lambda k, shape: jax.random.uniform(k, shape, jnp.float32, -s, s)
    return {
        "w_ih": u(ks[0], (3 * hidden_size, input_size)),
        "w_hh": u(ks[1], (3 * hidden_size, hidden_size)),
        "b_ih": u(ks[2], (3 * hidden_size,)),
        "b_hh": u(ks[3], (3 * hidden_size,)),
        "w_out": u(ks[4], (n_output, hidden_size)),
        "b_out": u(ks[5], (n_output,)),
    }


if __name__ == "__main__":
    # Small shapes consistent with the module's config:
    #   n_input_feature=4, hidden_size=32, n_output=6, seq=8, batch=8
    B, T, F, H, O = 8, 8, 4, 32, 6

    key = jax.random.PRNGKey(0)
    k_x, k_p = jax.random.split(key)
    x = jax.random.normal(k_x, (B, T, F), jnp.float32)
    params = init_params(k_p, F, H, O)

    out = custom_gru_forward(x, params)
    out = jax.block_until_ready(out)

    ref = jax.block_until_ready(reference_forward(x, params))
    assert out.shape == (B, O)
    assert jnp.allclose(out, ref, rtol=1e-4, atol=1e-4), "Pallas GRU mismatch vs reference"

    print("KERNEL_OK")
</pallas_src>

<mosaic_0001>
module attributes {stable_mosaic.version = 11 : i64} {
  func.func @_gru_kernel(%arg0: i32, %arg1: memref<64x4xf32, #tpu.memory_space<vmem>>, %arg2: memref<4x128xf32, #tpu.memory_space<vmem>>, %arg3: memref<32x128xf32, #tpu.memory_space<vmem>>, %arg4: memref<1x128xf32, #tpu.memory_space<vmem>>, %arg5: memref<1x128xf32, #tpu.memory_space<vmem>>, %arg6: memref<32x6xf32, #tpu.memory_space<vmem>>, %arg7: memref<1x6xf32, #tpu.memory_space<vmem>>, %arg8: memref<8x6xf32, #tpu.memory_space<vmem>>) attributes {dimension_semantics = [#tpu.dimension_semantics<arbitrary>], iteration_bounds = array<i64: 1>, scalar_prefetch = 0 : i64, scratch_operands = 0 : i64, tpu.core_type = #tpu.core_type<tc>, window_params = [{pipeline_mode = #tpu.pipeline_mode<synchronous>, transform_indices = @transform_0, window_bounds = array<i64: 64, 4>}, {pipeline_mode = #tpu.pipeline_mode<synchronous>, transform_indices = @transform_1, window_bounds = array<i64: 4, 128>}, {pipeline_mode = #tpu.pipeline_mode<synchronous>, transform_indices = @transform_2, window_bounds = array<i64: 32, 128>}, {pipeline_mode = #tpu.pipeline_mode<synchronous>, transform_indices = @transform_3, window_bounds = array<i64: 1, 128>}, {pipeline_mode = #tpu.pipeline_mode<synchronous>, transform_indices = @transform_4, window_bounds = array<i64: 1, 128>}, {pipeline_mode = #tpu.pipeline_mode<synchronous>, transform_indices = @transform_5, window_bounds = array<i64: 32, 6>}, {pipeline_mode = #tpu.pipeline_mode<synchronous>, transform_indices = @transform_6, window_bounds = array<i64: 1, 6>}, {pipeline_mode = #tpu.pipeline_mode<synchronous>, transform_indices = @transform_7, window_bounds = array<i64: 8, 6>}]} {
    %c0 = arith.constant 0 : index
    %c0_0 = arith.constant 0 : index
    %0 = vector.load %arg1[%c0, %c0_0] : memref<64x4xf32, #tpu.memory_space<vmem>>, vector<64x4xf32>
    %c0_1 = arith.constant 0 : index
    %c0_2 = arith.constant 0 : index
    %1 = vector.load %arg2[%c0_1, %c0_2] : memref<4x128xf32, #tpu.memory_space<vmem>>, vector<4x128xf32>
    %cst = arith.constant dense<0.000000e+00> : vector<64x128xf32>
    %2 = tpu.matmul %0, %1, %cst {dimension_numbers = #tpu.dot_dimension_numbers<[1], [0], [0], [1], [0, 0, 1, 1], [], []>} : vector<64x4xf32>, vector<4x128xf32>, vector<64x128xf32> -> vector<64x128xf32>
    %c0_3 = arith.constant 0 : index
    %c0_4 = arith.constant 0 : index
    %3 = vector.load %arg4[%c0_3, %c0_4] : memref<1x128xf32, #tpu.memory_space<vmem>>, vector<1x128xf32>
    %4 = vector.broadcast %3 : vector<1x128xf32> to vector<64x128xf32>
    %5 = arith.addf %2, %4 : vector<64x128xf32>
    %c0_5 = arith.constant 0 : index
    %c0_6 = arith.constant 0 : index
    %6 = vector.load %arg3[%c0_5, %c0_6] : memref<32x128xf32, #tpu.memory_space<vmem>>, vector<32x128xf32>
    %c0_7 = arith.constant 0 : index
    %c0_8 = arith.constant 0 : index
    %7 = vector.load %arg5[%c0_7, %c0_8] : memref<1x128xf32, #tpu.memory_space<vmem>>, vector<1x128xf32>
    %cst_9 = arith.constant 0.000000e+00 : f32
    %8 = vector.broadcast %cst_9 : f32 to vector<8x32xf32>
    %9 = vector.extract_strided_slice %5 {offsets = [0, 0], sizes = [8, 128], strides = [1, 1]} : vector<64x128xf32> to vector<8x128xf32>
    %cst_10 = arith.constant dense<0.000000e+00> : vector<8x128xf32>
    %10 = tpu.matmul %8, %6, %cst_10 {dimension_numbers = #tpu.dot_dimension_numbers<[1], [0], [0], [1], [0, 0, 1, 1], [], []>} : vector<8x32xf32>, vector<32x128xf32>, vector<8x128xf32> -> vector<8x128xf32>
    %11 = vector.broadcast %7 : vector<1x128xf32> to vector<8x128xf32>
    %12 = arith.addf %10, %11 : vector<8x128xf32>
    %13 = vector.extract_strided_slice %9 {offsets = [0, 0], sizes = [8, 32], strides = [1, 1]} : vector<8x128xf32> to vector<8x32xf32>
    %14 = vector.extract_strided_slice %12 {offsets = [0, 0], sizes = [8, 32], strides = [1, 1]} : vector<8x128xf32> to vector<8x32xf32>
    %15 = arith.addf %13, %14 : vector<8x32xf32>
    %16 = arith.negf %15 : vector<8x32xf32>
    %17 = math.exp %16 : vector<8x32xf32>
    %cst_11 = arith.constant 1.000000e+00 : f32
    %18 = vector.broadcast %cst_11 : f32 to vector<8x32xf32>
    %19 = arith.addf %18, %17 : vector<8x32xf32>
    %20 = arith.divf %18, %19 : vector<8x32xf32>
    %21 = vector.extract_strided_slice %9 {offsets = [0, 32], sizes = [8, 32], strides = [1, 1]} : vector<8x128xf32> to vector<8x32xf32>
    %22 = vector.extract_strided_slice %12 {offsets = [0, 32], sizes = [8, 32], strides = [1, 1]} : vector<8x128xf32> to vector<8x32xf32>
    %23 = arith.addf %21, %22 : vector<8x32xf32>
    %24 = arith.negf %23 : vector<8x32xf32>
    %25 = math.exp %24 : vector<8x32xf32>
    %cst_12 = arith.constant 1.000000e+00 : f32
    %26 = vector.broadcast %cst_12 : f32 to vector<8x32xf32>
    %27 = arith.addf %26, %25 : vector<8x32xf32>
    %28 = arith.divf %26, %27 : vector<8x32xf32>
    %29 = vector.extract_strided_slice %9 {offsets = [0, 64], sizes = [8, 32], strides = [1, 1]} : vector<8x128xf32> to vector<8x32xf32>
    %30 = vector.extract_strided_slice %12 {offsets = [0, 64], sizes = [8, 32], strides = [1, 1]} : vector<8x128xf32> to vector<8x32xf32>
    %31 = arith.mulf %20, %30 : vector<8x32xf32>
    %32 = arith.addf %29, %31 : vector<8x32xf32>
    %33 = math.tanh %32 : vector<8x32xf32>
    %cst_13 = arith.constant 1.000000e+00 : f32
    %34 = vector.broadcast %cst_13 : f32 to vector<8x32xf32>
    %35 = arith.subf %34, %28 : vector<8x32xf32>
    %36 = arith.mulf %35, %33 : vector<8x32xf32>
    %37 = arith.mulf %28, %8 : vector<8x32xf32>
    %38 = arith.addf %36, %37 : vector<8x32xf32>
    %39 = vector.extract_strided_slice %5 {offsets = [8, 0], sizes = [8, 128], strides = [1, 1]} : vector<64x128xf32> to vector<8x128xf32>
    %cst_14 = arith.constant dense<0.000000e+00> : vector<8x128xf32>
    %40 = tpu.matmul %38, %6, %cst_14 {dimension_numbers = #tpu.dot_dimension_numbers<[1], [0], [0], [1], [0, 0, 1, 1], [], []>} : vector<8x32xf32>, vector<32x128xf32>, vector<8x128xf32> -> vector<8x128xf32>
    %41 = vector.broadcast %7 : vector<1x128xf32> to vector<8x128xf32>
    %42 = arith.addf %40, %41 : vector<8x128xf32>
    %43 = vector.extract_strided_slice %39 {offsets = [0, 0], sizes = [8, 32], strides = [1, 1]} : vector<8x128xf32> to vector<8x32xf32>
    %44 = vector.extract_strided_slice %42 {offsets = [0, 0], sizes = [8, 32], strides = [1, 1]} : vector<8x128xf32> to vector<8x32xf32>
    %45 = arith.addf %43, %44 : vector<8x32xf32>
    %46 = arith.negf %45 : vector<8x32xf32>
    %47 = math.exp %46 : vector<8x32xf32>
    %cst_15 = arith.constant 1.000000e+00 : f32
    %48 = vector.broadcast %cst_15 : f32 to vector<8x32xf32>
    %49 = arith.addf %48, %47 : vector<8x32xf32>
    %50 = arith.divf %48, %49 : vector<8x32xf32>
    %51 = vector.extract_strided_slice %39 {offsets = [0, 32], sizes = [8, 32], strides = [1, 1]} : vector<8x128xf32> to vector<8x32xf32>
    %52 = vector.extract_strided_slice %42 {offsets = [0, 32], sizes = [8, 32], strides = [1, 1]} : vector<8x128xf32> to vector<8x32xf32>
    %53 = arith.addf %51, %52 : vector<8x32xf32>
    %54 = arith.negf %53 : vector<8x32xf32>
    %55 = math.exp %54 : vector<8x32xf32>
    %cst_16 = arith.constant 1.000000e+00 : f32
    %56 = vector.broadcast %cst_16 : f32 to vector<8x32xf32>
    %57 = arith.addf %56, %55 : vector<8x32xf32>
    %58 = arith.divf %56, %57 : vector<8x32xf32>
    %59 = vector.extract_strided_slice %39 {offsets = [0, 64], sizes = [8, 32], strides = [1, 1]} : vector<8x128xf32> to vector<8x32xf32>
    %60 = vector.extract_strided_slice %42 {offsets = [0, 64], sizes = [8, 32], strides = [1, 1]} : vector<8x128xf32> to vector<8x32xf32>
    %61 = arith.mulf %50, %60 : vector<8x32xf32>
    %62 = arith.addf %59, %61 : vector<8x32xf32>
    %63 = math.tanh %62 : vector<8x32xf32>
    %cst_17 = arith.constant 1.000000e+00 : f32
    %64 = vector.broadcast %cst_17 : f32 to vector<8x32xf32>
    %65 = arith.subf %64, %58 : vector<8x32xf32>
    %66 = arith.mulf %65, %63 : vector<8x32xf32>
    %67 = arith.mulf %58, %38 : vector<8x32xf32>
    %68 = arith.addf %66, %67 : vector<8x32xf32>
    %69 = vector.extract_strided_slice %5 {offsets = [16, 0], sizes = [8, 128], strides = [1, 1]} : vector<64x128xf32> to vector<8x128xf32>
    %cst_18 = arith.constant dense<0.000000e+00> : vector<8x128xf32>
    %70 = tpu.matmul %68, %6, %cst_18 {dimension_numbers = #tpu.dot_dimension_numbers<[1], [0], [0], [1], [0, 0, 1, 1], [], []>} : vector<8x32xf32>, vector<32x128xf32>, vector<8x128xf32> -> vector<8x128xf32>
    %71 = vector.broadcast %7 : vector<1x128xf32> to vector<8x128xf32>
    %72 = arith.addf %70, %71 : vector<8x128xf32>
    %73 = vector.extract_strided_slice %69 {offsets = [0, 0], sizes = [8, 32], strides = [1, 1]} : vector<8x128xf32> to vector<8x32xf32>
    %74 = vector.extract_strided_slice %72 {offsets = [0, 0], sizes = [8, 32], strides = [1, 1]} : vector<8x128xf32> to vector<8x32xf32>
    %75 = arith.addf %73, %74 : vector<8x32xf32>
    %76 = arith.negf %75 : vector<8x32xf32>
    %77 = math.exp %76 : vector<8x32xf32>
    %cst_19 = arith.constant 1.000000e+00 : f32
    %78 = vector.broadcast %cst_19 : f32 to vector<8x32xf32>
    %79 = arith.addf %78, %77 : vector<8x32xf32>
    %80 = arith.divf %78, %79 : vector<8x32xf32>
    %81 = vector.extract_strided_slice %69 {offsets = [0, 32], sizes = [8, 32], strides = [1, 1]} : vector<8x128xf32> to vector<8x32xf32>
    %82 = vector.extract_strided_slice %72 {offsets = [0, 32], sizes = [8, 32], strides = [1, 1]} : vector<8x128xf32> to vector<8x32xf32>
    %83 = arith.addf %81, %82 : vector<8x32xf32>
    %84 = arith.negf %83 : vector<8x32xf32>
    %85 = math.exp %84 : vector<8x32xf32>
    %cst_20 = arith.constant 1.000000e+00 : f32
    %86 = vector.broadcast %cst_20 : f32 to vector<8x32xf32>
    %87 = arith.addf %86, %85 : vector<8x32xf32>
    %88 = arith.divf %86, %87 : vector<8x32xf32>
    %89 = vector.extract_strided_slice %69 {offsets = [0, 64], sizes = [8, 32], strides = [1, 1]} : vector<8x128xf32> to vector<8x32xf32>
    %90 = vector.extract_strided_slice %72 {offsets = [0, 64], sizes = [8, 32], strides = [1, 1]} : vector<8x128xf32> to vector<8x32xf32>
    %91 = arith.mulf %80, %90 : vector<8x32xf32>
    %92 = arith.addf %89, %91 : vector<8x32xf32>
    %93 = math.tanh %92 : vector<8x32xf32>
    %cst_21 = arith.constant 1.000000e+00 : f32
    %94 = vector.broadcast %cst_21 : f32 to vector<8x32xf32>
    %95 = arith.subf %94, %88 : vector<8x32xf32>
    %96 = arith.mulf %95, %93 : vector<8x32xf32>
    %97 = arith.mulf %88, %68 : vector<8x32xf32>
    %98 = arith.addf %96, %97 : vector<8x32xf32>
    %99 = vector.extract_strided_slice %5 {offsets = [24, 0], sizes = [8, 128], strides = [1, 1]} : vector<64x128xf32> to vector<8x128xf32>
    %cst_22 = arith.constant dense<0.000000e+00> : vector<8x128xf32>
    %100 = tpu.matmul %98, %6, %cst_22 {dimension_numbers = #tpu.dot_dimension_numbers<[1], [0], [0], [1], [0, 0, 1, 1], [], []>} : vector<8x32xf32>, vector<32x128xf32>, vector<8x128xf32> -> vector<8x128xf32>
    %101 = vector.broadcast %7 : vector<1x128xf32> to vector<8x128xf32>
    %102 = arith.addf %100, %101 : vector<8x128xf32>
    %103 = vector.extract_strided_slice %99 {offsets = [0, 0], sizes = [8, 32], strides = [1, 1]} : vector<8x128xf32> to vector<8x32xf32>
    %104 = vector.extract_strided_slice %102 {offsets = [0, 0], sizes = [8, 32], strides = [1, 1]} : vector<8x128xf32> to vector<8x32xf32>
    %105 = arith.addf %103, %104 : vector<8x32xf32>
    %106 = arith.negf %105 : vector<8x32xf32>
    %107 = math.exp %106 : vector<8x32xf32>
    %cst_23 = arith.constant 1.000000e+00 : f32
    %108 = vector.broadcast %cst_23 : f32 to vector<8x32xf32>
    %109 = arith.addf %108, %107 : vector<8x32xf32>
    %110 = arith.divf %108, %109 : vector<8x32xf32>
    %111 = vector.extract_strided_slice %99 {offsets = [0, 32], sizes = [8, 32], strides = [1, 1]} : vector<8x128xf32> to vector<8x32xf32>
    %112 = vector.extract_strided_slice %102 {offsets = [0, 32], sizes = [8, 32], strides = [1, 1]} : vector<8x128xf32> to vector<8x32xf32>
    %113 = arith.addf %111, %112 : vector<8x32xf32>
    %114 = arith.negf %113 : vector<8x32xf32>
    %115 = math.exp %114 : vector<8x32xf32>
    %cst_24 = arith.constant 1.000000e+00 : f32
    %116 = vector.broadcast %cst_24 : f32 to vector<8x32xf32>
    %117 = arith.addf %116, %115 : vector<8x32xf32>
    %118 = arith.divf %116, %117 : vector<8x32xf32>
    %119 = vector.extract_strided_slice %99 {offsets = [0, 64], sizes = [8, 32], strides = [1, 1]} : vector<8x128xf32> to vector<8x32xf32>
    %120 = vector.extract_strided_slice %102 {offsets = [0, 64], sizes = [8, 32], strides = [1, 1]} : vector<8x128xf32> to vector<8x32xf32>
    %121 = arith.mulf %110, %120 : vector<8x32xf32>
    %122 = arith.addf %119, %121 : vector<8x32xf32>
    %123 = math.tanh %122 : vector<8x32xf32>
    %cst_25 = arith.constant 1.000000e+00 : f32
    %124 = vector.broadcast %cst_25 : f32 to vector<8x32xf32>
    %125 = arith.subf %124, %118 : vector<8x32xf32>
    %126 = arith.mulf %125, %123 : vector<8x32xf32>
    %127 = arith.mulf %118, %98 : vector<8x32xf32>
    %128 = arith.addf %126, %127 : vector<8x32xf32>
    %129 = vector.extract_strided_slice %5 {offsets = [32, 0], sizes = [8, 128], strides = [1, 1]} : vector<64x128xf32> to vector<8x128xf32>
    %cst_26 = arith.constant dense<0.000000e+00> : vector<8x128xf32>
    %130 = tpu.matmul %128, %6, %cst_26 {dimension_numbers = #tpu.dot_dimension_numbers<[1], [0], [0], [1], [0, 0, 1, 1], [], []>} : vector<8x32xf32>, vector<32x128xf32>, vector<8x128xf32> -> vector<8x128xf32>
    %131 = vector.broadcast %7 : vector<1x128xf32> to vector<8x128xf32>
    %132 = arith.addf %130, %131 : vector<8x128xf32>
    %133 = vector.extract_strided_slice %129 {offsets = [0, 0], sizes = [8, 32], strides = [1, 1]} : vector<8x128xf32> to vector<8x32xf32>
    %134 = vector.extract_strided_slice %132 {offsets = [0, 0], sizes = [8, 32], strides = [1, 1]} : vector<8x128xf32> to vector<8x32xf32>
    %135 = arith.addf %133, %134 : vector<8x32xf32>
    %136 = arith.negf %135 : vector<8x32xf32>
    %137 = math.exp %136 : vector<8x32xf32>
    %cst_27 = arith.constant 1.000000e+00 : f32
    %138 = vector.broadcast %cst_27 : f32 to vector<8x32xf32>
    %139 = arith.addf %138, %137 : vector<8x32xf32>
    %140 = arith.divf %138, %139 : vector<8x32xf32>
    %141 = vector.extract_strided_slice %129 {offsets = [0, 32], sizes = [8, 32], strides = [1, 1]} : vector<8x128xf32> to vector<8x32xf32>
    %142 = vector.extract_strided_slice %132 {offsets = [0, 32], sizes = [8, 32], strides = [1, 1]} : vector<8x128xf32> to vector<8x32xf32>
    %143 = arith.addf %141, %142 : vector<8x32xf32>
    %144 = arith.negf %143 : vector<8x32xf32>
    %145 = math.exp %144 : vector<8x32xf32>
    %cst_28 = arith.constant 1.000000e+00 : f32
    %146 = vector.broadcast %cst_28 : f32 to vector<8x32xf32>
    %147 = arith.addf %146, %145 : vector<8x32xf32>
    %148 = arith.divf %146, %147 : vector<8x32xf32>
    %149 = vector.extract_strided_slice %129 {offsets = [0, 64], sizes = [8, 32], strides = [1, 1]} : vector<8x128xf32> to vector<8x32xf32>
    %150 = vector.extract_strided_slice %132 {offsets = [0, 64], sizes = [8, 32], strides = [1, 1]} : vector<8x128xf32> to vector<8x32xf32>
    %151 = arith.mulf %140, %150 : vector<8x32xf32>
    %152 = arith.addf %149, %151 : vector<8x32xf32>
    %153 = math.tanh %152 : vector<8x32xf32>
    %cst_29 = arith.constant 1.000000e+00 : f32
    %154 = vector.broadcast %cst_29 : f32 to vector<8x32xf32>
    %155 = arith.subf %154, %148 : vector<8x32xf32>
    %156 = arith.mulf %155, %153 : vector<8x32xf32>
    %157 = arith.mulf %148, %128 : vector<8x32xf32>
    %158 = arith.addf %156, %157 : vector<8x32xf32>
    %159 = vector.extract_strided_slice %5 {offsets = [40, 0], sizes = [8, 128], strides = [1, 1]} : vector<64x128xf32> to vector<8x128xf32>
    %cst_30 = arith.constant dense<0.000000e+00> : vector<8x128xf32>
    %160 = tpu.matmul %158, %6, %cst_30 {dimension_numbers = #tpu.dot_dimension_numbers<[1], [0], [0], [1], [0, 0, 1, 1], [], []>} : vector<8x32xf32>, vector<32x128xf32>, vector<8x128xf32> -> vector<8x128xf32>
    %161 = vector.broadcast %7 : vector<1x128xf32> to vector<8x128xf32>
    %162 = arith.addf %160, %161 : vector<8x128xf32>
    %163 = vector.extract_strided_slice %159 {offsets = [0, 0], sizes = [8, 32], strides = [1, 1]} : vector<8x128xf32> to vector<8x32xf32>
    %164 = vector.extract_strided_slice %162 {offsets = [0, 0], sizes = [8, 32], strides = [1, 1]} : vector<8x128xf32> to vector<8x32xf32>
    %165 = arith.addf %163, %164 : vector<8x32xf32>
    %166 = arith.negf %165 : vector<8x32xf32>
    %167 = math.exp %166 : vector<8x32xf32>
    %cst_31 = arith.constant 1.000000e+00 : f32
    %168 = vector.broadcast %cst_31 : f32 to vector<8x32xf32>
    %169 = arith.addf %168, %167 : vector<8x32xf32>
    %170 = arith.divf %168, %169 : vector<8x32xf32>
    %171 = vector.extract_strided_slice %159 {offsets = [0, 32], sizes = [8, 32], strides = [1, 1]} : vector<8x128xf32> to vector<8x32xf32>
    %172 = vector.extract_strided_slice %162 {offsets = [0, 32], sizes = [8, 32], strides = [1, 1]} : vector<8x128xf32> to vector<8x32xf32>
    %173 = arith.addf %171, %172 : vector<8x32xf32>
    %174 = arith.negf %173 : vector<8x32xf32>
    %175 = math.exp %174 : vector<8x32xf32>
    %cst_32 = arith.constant 1.000000e+00 : f32
    %176 = vector.broadcast %cst_32 : f32 to vector<8x32xf32>
    %177 = arith.addf %176, %175 : vector<8x32xf32>
    %178 = arith.divf %176, %177 : vector<8x32xf32>
    %179 = vector.extract_strided_slice %159 {offsets = [0, 64], sizes = [8, 32], strides = [1, 1]} : vector<8x128xf32> to vector<8x32xf32>
    %180 = vector.extract_strided_slice %162 {offsets = [0, 64], sizes = [8, 32], strides = [1, 1]} : vector<8x128xf32> to vector<8x32xf32>
    %181 = arith.mulf %170, %180 : vector<8x32xf32>
    %182 = arith.addf %179, %181 : vector<8x32xf32>
    %183 = math.tanh %182 : vector<8x32xf32>
    %cst_33 = arith.constant 1.000000e+00 : f32
    %184 = vector.broadcast %cst_33 : f32 to vector<8x32xf32>
    %185 = arith.subf %184, %178 : vector<8x32xf32>
    %186 = arith.mulf %185, %183 : vector<8x32xf32>
    %187 = arith.mulf %178, %158 : vector<8x32xf32>
    %188 = arith.addf %186, %187 : vector<8x32xf32>
    %189 = vector.extract_strided_slice %5 {offsets = [48, 0], sizes = [8, 128], strides = [1, 1]} : vector<64x128xf32> to vector<8x128xf32>
    %cst_34 = arith.constant dense<0.000000e+00> : vector<8x128xf32>
    %190 = tpu.matmul %188, %6, %cst_34 {dimension_numbers = #tpu.dot_dimension_numbers<[1], [0], [0], [1], [0, 0, 1, 1], [], []>} : vector<8x32xf32>, vector<32x128xf32>, vector<8x128xf32> -> vector<8x128xf32>
    %191 = vector.broadcast %7 : vector<1x128xf32> to vector<8x128xf32>
    %192 = arith.addf %190, %191 : vector<8x128xf32>
    %193 = vector.extract_strided_slice %189 {offsets = [0, 0], sizes = [8, 32], strides = [1, 1]} : vector<8x128xf32> to vector<8x32xf32>
    %194 = vector.extract_strided_slice %192 {offsets = [0, 0], sizes = [8, 32], strides = [1, 1]} : vector<8x128xf32> to vector<8x32xf32>
    %195 = arith.addf %193, %194 : vector<8x32xf32>
    %196 = arith.negf %195 : vector<8x32xf32>
    %197 = math.exp %196 : vector<8x32xf32>
    %cst_35 = arith.constant 1.000000e+00 : f32
    %198 = vector.broadcast %cst_35 : f32 to vector<8x32xf32>
    %199 = arith.addf %198, %197 : vector<8x32xf32>
    %200 = arith.divf %198, %199 : vector<8x32xf32>
    %201 = vector.extract_strided_slice %189 {offsets = [0, 32], sizes = [8, 32], strides = [1, 1]} : vector<8x128xf32> to vector<8x32xf32>
    %202 = vector.extract_strided_slice %192 {offsets = [0, 32], sizes = [8, 32], strides = [1, 1]} : vector<8x128xf32> to vector<8x32xf32>
    %203 = arith.addf %201, %202 : vector<8x32xf32>
    %204 = arith.negf %203 : vector<8x32xf32>
    %205 = math.exp %204 : vector<8x32xf32>
    %cst_36 = arith.constant 1.000000e+00 : f32
    %206 = vector.broadcast %cst_36 : f32 to vector<8x32xf32>
    %207 = arith.addf %206, %205 : vector<8x32xf32>
    %208 = arith.divf %206, %207 : vector<8x32xf32>
    %209 = vector.extract_strided_slice %189 {offsets = [0, 64], sizes = [8, 32], strides = [1, 1]} : vector<8x128xf32> to vector<8x32xf32>
    %210 = vector.extract_strided_slice %192 {offsets = [0, 64], sizes = [8, 32], strides = [1, 1]} : vector<8x128xf32> to vector<8x32xf32>
    %211 = arith.mulf %200, %210 : vector<8x32xf32>
    %212 = arith.addf %209, %211 : vector<8x32xf32>
    %213 = math.tanh %212 : vector<8x32xf32>
    %cst_37 = arith.constant 1.000000e+00 : f32
    %214 = vector.broadcast %cst_37 : f32 to vector<8x32xf32>
    %215 = arith.subf %214, %208 : vector<8x32xf32>
    %216 = arith.mulf %215, %213 : vector<8x32xf32>
    %217 = arith.mulf %208, %188 : vector<8x32xf32>
    %218 = arith.addf %216, %217 : vector<8x32xf32>
    %219 = vector.extract_strided_slice %5 {offsets = [56, 0], sizes = [8, 128], strides = [1, 1]} : vector<64x128xf32> to vector<8x128xf32>
    %cst_38 = arith.constant dense<0.000000e+00> : vector<8x128xf32>
    %220 = tpu.matmul %218, %6, %cst_38 {dimension_numbers = #tpu.dot_dimension_numbers<[1], [0], [0], [1], [0, 0, 1, 1], [], []>} : vector<8x32xf32>, vector<32x128xf32>, vector<8x128xf32> -> vector<8x128xf32>
    %221 = vector.broadcast %7 : vector<1x128xf32> to vector<8x128xf32>
    %222 = arith.addf %220, %221 : vector<8x128xf32>
    %223 = vector.extract_strided_slice %219 {offsets = [0, 0], sizes = [8, 32], strides = [1, 1]} : vector<8x128xf32> to vector<8x32xf32>
    %224 = vector.extract_strided_slice %222 {offsets = [0, 0], sizes = [8, 32], strides = [1, 1]} : vector<8x128xf32> to vector<8x32xf32>
    %225 = arith.addf %223, %224 : vector<8x32xf32>
    %226 = arith.negf %225 : vector<8x32xf32>
    %227 = math.exp %226 : vector<8x32xf32>
    %cst_39 = arith.constant 1.000000e+00 : f32
    %228 = vector.broadcast %cst_39 : f32 to vector<8x32xf32>
    %229 = arith.addf %228, %227 : vector<8x32xf32>
    %230 = arith.divf %228, %229 : vector<8x32xf32>
    %231 = vector.extract_strided_slice %219 {offsets = [0, 32], sizes = [8, 32], strides = [1, 1]} : vector<8x128xf32> to vector<8x32xf32>
    %232 = vector.extract_strided_slice %222 {offsets = [0, 32], sizes = [8, 32], strides = [1, 1]} : vector<8x128xf32> to vector<8x32xf32>
    %233 = arith.addf %231, %232 : vector<8x32xf32>
    %234 = arith.negf %233 : vector<8x32xf32>
    %235 = math.exp %234 : vector<8x32xf32>
    %cst_40 = arith.constant 1.000000e+00 : f32
    %236 = vector.broadcast %cst_40 : f32 to vector<8x32xf32>
    %237 = arith.addf %236, %235 : vector<8x32xf32>
    %238 = arith.divf %236, %237 : vector<8x32xf32>
    %239 = vector.extract_strided_slice %219 {offsets = [0, 64], sizes = [8, 32], strides = [1, 1]} : vector<8x128xf32> to vector<8x32xf32>
    %240 = vector.extract_strided_slice %222 {offsets = [0, 64], sizes = [8, 32], strides = [1, 1]} : vector<8x128xf32> to vector<8x32xf32>
    %241 = arith.mulf %230, %240 : vector<8x32xf32>
    %242 = arith.addf %239, %241 : vector<8x32xf32>
    %243 = math.tanh %242 : vector<8x32xf32>
    %cst_41 = arith.constant 1.000000e+00 : f32
    %244 = vector.broadcast %cst_41 : f32 to vector<8x32xf32>
    %245 = arith.subf %244, %238 : vector<8x32xf32>
    %246 = arith.mulf %245, %243 : vector<8x32xf32>
    %247 = arith.mulf %238, %218 : vector<8x32xf32>
    %248 = arith.addf %246, %247 : vector<8x32xf32>
    %c0_42 = arith.constant 0 : index
    %c0_43 = arith.constant 0 : index
    %249 = vector.load %arg6[%c0_42, %c0_43] : memref<32x6xf32, #tpu.memory_space<vmem>>, vector<32x6xf32>
    %cst_44 = arith.constant dense<0.000000e+00> : vector<8x6xf32>
    %250 = tpu.matmul %248, %249, %cst_44 {dimension_numbers = #tpu.dot_dimension_numbers<[1], [0], [0], [1], [0, 0, 1, 1], [], []>} : vector<8x32xf32>, vector<32x6xf32>, vector<8x6xf32> -> vector<8x6xf32>
    %c0_45 = arith.constant 0 : index
    %c0_46 = arith.constant 0 : index
    %251 = vector.load %arg7[%c0_45, %c0_46] : memref<1x6xf32, #tpu.memory_space<vmem>>, vector<1x6xf32>
    %252 = vector.broadcast %251 : vector<1x6xf32> to vector<8x6xf32>
    %253 = arith.addf %250, %252 : vector<8x6xf32>
    %c0_47 = arith.constant 0 : index
    %c0_48 = arith.constant 0 : index
    %254 = vector.load %arg8[%c0_47, %c0_48] : memref<8x6xf32, #tpu.memory_space<vmem>>, vector<8x6xf32>
    tpu.vector_store %arg8[%c0_47, %c0_48], %253 {strides = array<i32>} : memref<8x6xf32, #tpu.memory_space<vmem>>, vector<8x6xf32>,
    return
  }
  func.func @transform_0(%arg0: i32) -> (i32, i32) {
    %c0_i32 = arith.constant 0 : i32
    %c0_i32_0 = arith.constant 0 : i32
    %c0_i32_1 = arith.constant 0 : i32
    return %c0_i32, %c0_i32_0 : i32, i32
  }
  func.func @transform_1(%arg0: i32) -> (i32, i32) {
    %c0_i32 = arith.constant 0 : i32
    %c0_i32_0 = arith.constant 0 : i32
    %c0_i32_1 = arith.constant 0 : i32
    return %c0_i32, %c0_i32_0 : i32, i32
  }
  func.func @transform_2(%arg0: i32) -> (i32, i32) {
    %c0_i32 = arith.constant 0 : i32
    %c0_i32_0 = arith.constant 0 : i32
    %c0_i32_1 = arith.constant 0 : i32
    return %c0_i32, %c0_i32_0 : i32, i32
  }
  func.func @transform_3(%arg0: i32) -> (i32, i32) {
    %c0_i32 = arith.constant 0 : i32
    %c0_i32_0 = arith.constant 0 : i32
    %c0_i32_1 = arith.constant 0 : i32
    return %c0_i32, %c0_i32_0 : i32, i32
  }
  func.func @transform_4(%arg0: i32) -> (i32, i32) {
    %c0_i32 = arith.constant 0 : i32
    %c0_i32_0 = arith.constant 0 : i32
    %c0_i32_1 = arith.constant 0 : i32
    return %c0_i32, %c0_i32_0 : i32, i32
  }
  func.func @transform_5(%arg0: i32) -> (i32, i32) {
    %c0_i32 = arith.constant 0 : i32
    %c0_i32_0 = arith.constant 0 : i32
    %c0_i32_1 = arith.constant 0 : i32
    return %c0_i32, %c0_i32_0 : i32, i32
  }
  func.func @transform_6(%arg0: i32) -> (i32, i32) {
    %c0_i32 = arith.constant 0 : i32
    %c0_i32_0 = arith.constant 0 : i32
    %c0_i32_1 = arith.constant 0 : i32
    return %c0_i32, %c0_i32_0 : i32, i32
  }
  func.func @transform_7(%arg0: i32) -> (i32, i32) {
    %c0_i32 = arith.constant 0 : i32
    %c0_i32_0 = arith.constant 0 : i32
    %c0_i32_1 = arith.constant 0 : i32
    return %c0_i32, %c0_i32_0 : i32, i32
  }
}

</mosaic_0001>

<llo_original>
// kernel: tpu_custom_call.1
$region0: #{tpu_custom_call.1}
  #allocation0 [shape = 'u32[]', space=smem, size = 0x4, offset = 0x4, fixed_abs, tag = 'smem constant byte address 0x4 - core index']
  #allocation1 [shape = 'u32[72,128]{1,0:T(1,128)}', space=vmem, size = 0x9000, scoped, tag = 'internal scratch']
  %s0 = inlined_call_operand.vmem [shape: f32[64,4], index: 0, kind: input, shape index: {}]
  %s1 = inlined_call_operand.vmem [shape: f32[4,128], index: 1, kind: input, shape index: {}]
  %s2 = inlined_call_operand.vmem [shape: f32[32,128], index: 2, kind: input, shape index: {}]
  %s3 = inlined_call_operand.vmem [shape: f32[1,128], index: 3, kind: input, shape index: {}]
  %s4 = inlined_call_operand.vmem [shape: f32[1,128], index: 4, kind: input, shape index: {}]
  %s5 = inlined_call_operand.vmem [shape: f32[32,6], index: 5, kind: input, shape index: {}]
  %s6 = inlined_call_operand.vmem [shape: f32[1,6], index: 6, kind: input, shape index: {}]
  %s7 = inlined_call_operand.hbm [shape: f32[8,6], index: 7, kind: output, shape index: {}]
  %s8 = sld [smem:[#allocation0]]
  $region38: #{tpu_custom_call.1} parent=0
    _
  %s10 = ssub.s32 1, %s8
  %s11 = scalar_select 0, %s10, %s8
  $region1: #{tpu_custom_call.1} parent=0
    #allocation2 [shape = 'u8[4096]{0}', space=vmem, size = 0x1000, scoped, tag = 'output window, operand 0, single buffered']
    #allocation3 [shape = 's32[1]{0}', space=sflag, size = 0x4, scoped, tag = 'scoped memory for tpu_custom_call.1']
    %12 = vsyncpa [#allocation3], 0
    // Predicated region
    $region2: #{tpu_custom_call.1} parent=1 // pred_check
      _
    $region3: #{tpu_custom_call.1} parent=1 // pred_check_branch
      %14 = sbr.rel (0) target = $region5
    $region4: #{tpu_custom_call.1} parent=1 // pred_region
      _
    $region5: #{tpu_custom_call.1} parent=1 // pred_fallthru
      _
    // Predicated region
    $region6: #{tpu_custom_call.1} parent=1 // pred_check
      _
    $region7: #{tpu_custom_call.1} parent=1 // pred_check_branch
      %16 = sbr.rel (0) target = $region9
    $region8: #{tpu_custom_call.1} parent=1 // pred_region
      _
    $region9: #{tpu_custom_call.1} parent=1 // pred_fallthru
      _
    // Predicated region
    $region10: #{tpu_custom_call.1} parent=1 // pred_check
      _
    $region11: #{tpu_custom_call.1} parent=1 // pred_check_branch
      %18 = sbr.rel (0) target = $region13
    $region12: #{tpu_custom_call.1} parent=1 // pred_region
      _
    $region13: #{tpu_custom_call.1} parent=1 // pred_fallthru
      _
    // Predicated region
    $region14: #{tpu_custom_call.1} parent=1 // pred_check
      _
    $region15: #{tpu_custom_call.1} parent=1 // pred_check_branch
      %20 = sbr.rel (0) target = $region17
    $region16: #{tpu_custom_call.1} parent=1 // pred_region
      _
    $region17: #{tpu_custom_call.1} parent=1 // pred_fallthru
      _
    // Predicated region
    $region18: #{tpu_custom_call.1} parent=1 // pred_check
      _
    $region19: #{tpu_custom_call.1} parent=1 // pred_check_branch
      %22 = sbr.rel (0) target = $region21
    $region20: #{tpu_custom_call.1} parent=1 // pred_region
      _
    $region21: #{tpu_custom_call.1} parent=1 // pred_fallthru
      _
    // Predicated region
    $region22: #{tpu_custom_call.1} parent=1 // pred_check
      _
    $region23: #{tpu_custom_call.1} parent=1 // pred_check_branch
      %24 = sbr.rel (0) target = $region25
    $region24: #{tpu_custom_call.1} parent=1 // pred_region
      _
    $region25: #{tpu_custom_call.1} parent=1 // pred_fallthru
      _
    // Predicated region
    $region26: #{tpu_custom_call.1} parent=1 // pred_check
      _
    $region27: #{tpu_custom_call.1} parent=1 // pred_check_branch
      %26 = sbr.rel (0) target = $region29
    $region28: #{tpu_custom_call.1} parent=1 // pred_region
      _
    $region29: #{tpu_custom_call.1} parent=1 // pred_fallthru
      _
    %v27 = vld [vmem:[%s0] sm:$0xff]
    %v28 = vld [vmem:[%s0 + $0x8] sm:$0xff]
    %v29 = vld [vmem:[%s0 + $0x10] sm:$0xff]
    %v30 = vld [vmem:[%s0 + $0x18] sm:$0xff]
    %v31 = vld [vmem:[%s0 + $0x20] sm:$0xff]
    %v32 = vld [vmem:[%s0 + $0x28] sm:$0xff]
    %v33 = vld [vmem:[%s0 + $0x30] sm:$0xff]
    %v34 = vld [vmem:[%s0 + $0x38] sm:$0xff]
    %v35 = vld [vmem:[%s1] sm:$0xf]
    %v36 = vld [vmem:[%s3] sm:$0x1]
    %v38 = vperm.slane %v36, 0
    %vm40 = vcmask 31744
    %v42 = vsel %vm40, %v27, 0
    %v45 = vsel %vm40, %v28, 0
    %v48 = vsel %vm40, %v29, 0
    %v51 = vsel %vm40, %v30, 0
    %v54 = vsel %vm40, %v31, 0
    %v57 = vsel %vm40, %v32, 0
    %v60 = vsel %vm40, %v33, 0
    %v63 = vsel %vm40, %v34, 0
    %vm65 = vcmask 1043456
    %v67 = vsel %vm65, %v35, 0
    %69 = vmatpush.msra.mxu0 0.0
    %70 = vmatpush.msra.mxu0 0.0
    %71 = vmatpush.msra.mxu0 0.0
    %72 = vmatpush.msra.mxu0 0.0
    %73 = vmatpush.msra.mxu0 0.0
    %74 = vmatpush.msra.mxu0 0.0
    %75 = vmatpush.msra.mxu0 0.0
    %76 = vmatpush.msra.mxu0 0.0
    %77 = vmatpush.msra.mxu0 0.0
    %78 = vmatpush.msra.mxu0 0.0
    %79 = vmatpush.msra.mxu0 0.0
    %80 = vmatpush.msra.mxu0 0.0
    %81 = vmatpush.msra.mxu0 0.0
    %82 = vmatpush.msra.mxu0 0.0
    %83 = vmatpush.msra.mxu0 0.0
    %84 = vmatpush.msra.mxu0 %v67
    %85 = vmatmul.f32.gmra.mxu0 %v42
    %v86 = vpop.f32.mrf.mxu0
    %v87 = vadd.f32 %v38, %v86
    %88 = vmatmul.f32.gmra.mxu0 %v45
    %v89 = vpop.f32.mrf.mxu0
    %v90 = vadd.f32 %v38, %v89
    %91 = vmatmul.f32.gmra.mxu0 %v48
    %v92 = vpop.f32.mrf.mxu0
    %v93 = vadd.f32 %v38, %v92
    %94 = vmatmul.f32.gmra.mxu0 %v51
    %v95 = vpop.f32.mrf.mxu0
    %v96 = vadd.f32 %v38, %v95
    %97 = vmatmul.f32.gmra.mxu0 %v54
    %v98 = vpop.f32.mrf.mxu0
    %v99 = vadd.f32 %v38, %v98
    %100 = vmatmul.f32.gmra.mxu0 %v57
    %v101 = vpop.f32.mrf.mxu0
    %v102 = vadd.f32 %v38, %v101
    %103 = vmatmul.f32.gmra.mxu0 %v60
    %v104 = vpop.f32.mrf.mxu0
    %v105 = vadd.f32 %v38, %v104
    %106 = vmatmul.f32.gmra.mxu0 %v63
    %v107 = vpop.f32.mrf.mxu0
    %v108 = vadd.f32 %v38, %v107
    %109 = vdwg.mxu0
    %v110 = vld [vmem:[%s2] sm:$0xff]
    %v111 = vld [vmem:[%s2 + $0x8] sm:$0xff]
    %v112 = vld [vmem:[%s2 + $0x10] sm:$0xff]
    %v113 = vld [vmem:[%s2 + $0x18] sm:$0xff]
    %v114 = vld [vmem:[%s4] sm:$0x1]
    %v116 = vperm.slane %v114, 0
    %vm118 = vcmask 261120
    %v120 = vsel %vm118, 0.0, 0
    %122 = vmatpush.msra.mxu0 0.0
    %123 = vmatpush.msra.mxu0 0.0
    %124 = vmatpush.msra.mxu0 0.0
    %125 = vmatpush.msra.mxu0 0.0
    %126 = vmatpush.msra.mxu0 0.0
    %127 = vmatpush.msra.mxu0 0.0
    %128 = vmatpush.msra.mxu0 0.0
    %129 = vmatpush.msra.mxu0 0.0
    %130 = vmatpush.msra.mxu0 0.0
    %131 = vmatpush.msra.mxu0 0.0
    %132 = vmatpush.msra.mxu0 0.0
    %133 = vmatpush.msra.mxu0 0.0
    %134 = vmatpush.msra.mxu0 %v113
    %135 = vmatpush.msra.mxu0 %v112
    %136 = vmatpush.msra.mxu0 %v111
    %137 = vmatpush.msra.mxu0 %v110
    %138 = vmatmul.f32.gmra.mxu0 %v120
    %v139 = vpop.f32.mrf.mxu0
    %v140 = vadd.f32 %v116, %v139
    %141 = vdwg.mxu0
    %v142 = vadd.f32 %v87, %v140
    %v143 = vxor.u32 %v142, 2147483648
    %v144 = vmul.f32 %v143, 1.442695
    %v145 = vpow.pop %v144
    %v146 = vadd.f32 %v145, 1.0
    %v147 = vrcp.pop %v146
    %v148 = vmul.f32 %v146, %v147
    %v149 = vsub.f32 1.0, %v148
    %v150 = vmul.f32 %v147, %v149
    %v151 = vadd.f32 %v147, %v150
    %vm152 = vweird.f32 %v146
    %vm153 = vweird.f32 %v147
    %vm154 = vmor %vm152, %vm153
    %v155 = vsel %vm154, %v147, %v151
    %v156 = vand.u32 2147483647, %v146
    %vm157 = vcmp.eq.f32.partialorder %v156, 8.507059e+37
    %v158 = vand.u32 %v146, 2147483648
    %v159 = vor.u32 1.1754944e-38, %v158
    %v160 = vsel %vm157, %v159, %v155
    %v161 = vmul.f32 1.0, %v160
    %163 = vrot.lane.b32.xlu0 %v140, 64
    %v164 = vpop.permute.xlu0 %163
    %v166 = vmul.f32 %v161, %v164
    %168 = vrot.lane.b32.xlu0 %v166, 64
    %v169 = vpop.permute.xlu0 %168
    %v171 = vadd.f32 %v87, %v169
    %v172 = vtanh.pop %v171
    %v173 = vsub.f32 1.0, %v161
    %175 = vrot.lane.b32.xlu0 %v172, 96
    %v176 = vpop.permute.xlu0 %175
    %v178 = vmul.f32 %v173, %v176
    %v179 = vmul.f32 %v161, 0.0
    %v180 = vadd.f32 %v178, %v179
    %182 = vrot.lane.b32.xlu0 %v180, 96
    %v183 = vpop.permute.xlu0 %182
    %v184 = vsel %vm118, %v183, 0
    %186 = vmatpush.msra.mxu0 0.0
    %187 = vmatpush.msra.mxu0 0.0
    %188 = vmatpush.msra.mxu0 0.0
    %189 = vmatpush.msra.mxu0 0.0
    %190 = vmatpush.msra.mxu0 0.0
    %191 = vmatpush.msra.mxu0 0.0
    %192 = vmatpush.msra.mxu0 0.0
    %193 = vmatpush.msra.mxu0 0.0
    %194 = vmatpush.msra.mxu0 0.0
    %195 = vmatpush.msra.mxu0 0.0
    %196 = vmatpush.msra.mxu0 0.0
    %197 = vmatpush.msra.mxu0 0.0
    %198 = vmatpush.msra.mxu0 %v113
    %199 = vmatpush.msra.mxu0 %v112
    %200 = vmatpush.msra.mxu0 %v111
    %201 = vmatpush.msra.mxu0 %v110
    %202 = vmatmul.f32.gmra.mxu0 %v184
    %v203 = vpop.f32.mrf.mxu0
    %v204 = vadd.f32 %v116, %v203
    %205 = vdwg.mxu0
    %v206 = vadd.f32 %v90, %v204
    %v207 = vxor.u32 %v206, 2147483648
    %v208 = vmul.f32 %v207, 1.442695
    %v209 = vpow.pop %v208
    %v210 = vadd.f32 %v209, 1.0
    %v211 = vrcp.pop %v210
    %v212 = vmul.f32 %v210, %v211
    %v213 = vsub.f32 1.0, %v212
    %v214 = vmul.f32 %v211, %v213
    %v215 = vadd.f32 %v211, %v214
    %vm216 = vweird.f32 %v210
    %vm217 = vweird.f32 %v211
    %vm218 = vmor %vm216, %vm217
    %v219 = vsel %vm218, %v211, %v215
    %v220 = vand.u32 2147483647, %v210
    %vm221 = vcmp.eq.f32.partialorder %v220, 8.507059e+37
    %v222 = vand.u32 %v210, 2147483648
    %v223 = vor.u32 1.1754944e-38, %v222
    %v224 = vsel %vm221, %v223, %v219
    %v225 = vmul.f32 1.0, %v224
    %227 = vrot.lane.b32.xlu0 %v204, 64
    %v228 = vpop.permute.xlu0 %227
    %v230 = vmul.f32 %v225, %v228
    %232 = vrot.lane.b32.xlu0 %v230, 64
    %v233 = vpop.permute.xlu0 %232
    %v235 = vadd.f32 %v90, %v233
    %v236 = vtanh.pop %v235
    %v237 = vsub.f32 1.0, %v225
    %239 = vrot.lane.b32.xlu0 %v236, 96
    %v240 = vpop.permute.xlu0 %239
    %v242 = vmul.f32 %v237, %v240
    %v243 = vmul.f32 %v225, %v180
    %v244 = vadd.f32 %v242, %v243
    %246 = vrot.lane.b32.xlu0 %v244, 96
    %v247 = vpop.permute.xlu0 %246
    %v248 = vsel %vm118, %v247, 0
    %250 = vmatpush.msra.mxu0 0.0
    %251 = vmatpush.msra.mxu0 0.0
    %252 = vmatpush.msra.mxu0 0.0
    %253 = vmatpush.msra.mxu0 0.0
    %254 = vmatpush.msra.mxu0 0.0
    %255 = vmatpush.msra.mxu0 0.0
    %256 = vmatpush.msra.mxu0 0.0
    %257 = vmatpush.msra.mxu0 0.0
    %258 = vmatpush.msra.mxu0 0.0
    %259 = vmatpush.msra.mxu0 0.0
    %260 = vmatpush.msra.mxu0 0.0
    %261 = vmatpush.msra.mxu0 0.0
    %262 = vmatpush.msra.mxu0 %v113
    %263 = vmatpush.msra.mxu0 %v112
    %264 = vmatpush.msra.mxu0 %v111
    %265 = vmatpush.msra.mxu0 %v110
    %266 = vmatmul.f32.gmra.mxu0 %v248
    %v267 = vpop.f32.mrf.mxu0
    %v268 = vadd.f32 %v116, %v267
    %269 = vdwg.mxu0
    %v270 = vadd.f32 %v93, %v268
    %v271 = vxor.u32 %v270, 2147483648
    %v272 = vmul.f32 %v271, 1.442695
    %v273 = vpow.pop %v272
    %v274 = vadd.f32 %v273, 1.0
    %v275 = vrcp.pop %v274
    %v276 = vmul.f32 %v274, %v275
    %v277 = vsub.f32 1.0, %v276
    %v278 = vmul.f32 %v275, %v277
    %v279 = vadd.f32 %v275, %v278
    %vm280 = vweird.f32 %v274
    %vm281 = vweird.f32 %v275
    %vm282 = vmor %vm280, %vm281
    %v283 = vsel %vm282, %v275, %v279
    %v284 = vand.u32 2147483647, %v274
    %vm285 = vcmp.eq.f32.partialorder %v284, 8.507059e+37
    %v286 = vand.u32 %v274, 2147483648
    %v287 = vor.u32 1.1754944e-38, %v286
    %v288 = vsel %vm285, %v287, %v283
    %v289 = vmul.f32 1.0, %v288
    %291 = vrot.lane.b32.xlu0 %v268, 64
    %v292 = vpop.permute.xlu0 %291
    %v294 = vmul.f32 %v289, %v292
    %296 = vrot.lane.b32.xlu0 %v294, 64
    %v297 = vpop.permute.xlu0 %296
    %v299 = vadd.f32 %v93, %v297
    %v300 = vtanh.pop %v299
    %v301 = vsub.f32 1.0, %v289
    %303 = vrot.lane.b32.xlu0 %v300, 96
    %v304 = vpop.permute.xlu0 %303
    %v306 = vmul.f32 %v301, %v304
    %v307 = vmul.f32 %v289, %v244
    %v308 = vadd.f32 %v306, %v307
    %310 = vrot.lane.b32.xlu0 %v308, 96
    %v311 = vpop.permute.xlu0 %310
    %v312 = vsel %vm118, %v311, 0
    %314 = vmatpush.msra.mxu0 0.0
    %315 = vmatpush.msra.mxu0 0.0
    %316 = vmatpush.msra.mxu0 0.0
    %317 = vmatpush.msra.mxu0 0.0
    %318 = vmatpush.msra.mxu0 0.0
    %319 = vmatpush.msra.mxu0 0.0
    %320 = vmatpush.msra.mxu0 0.0
    %321 = vmatpush.msra.mxu0 0.0
    %322 = vmatpush.msra.mxu0 0.0
    %323 = vmatpush.msra.mxu0 0.0
    %324 = vmatpush.msra.mxu0 0.0
    %325 = vmatpush.msra.mxu0 0.0
    %326 = vmatpush.msra.mxu0 %v113
    %327 = vmatpush.msra.mxu0 %v112
    %328 = vmatpush.msra.mxu0 %v111
    %329 = vmatpush.msra.mxu0 %v110
    %330 = vmatmul.f32.gmra.mxu0 %v312
    %v331 = vpop.f32.mrf.mxu0
    %v332 = vadd.f32 %v116, %v331
    %333 = vdwg.mxu0
    %v334 = vadd.f32 %v96, %v332
    %v335 = vxor.u32 %v334, 2147483648
    %v336 = vmul.f32 %v335, 1.442695
    %v337 = vpow.pop %v336
    %v338 = vadd.f32 %v337, 1.0
    %v339 = vrcp.pop %v338
    %v340 = vmul.f32 %v338, %v339
    %v341 = vsub.f32 1.0, %v340
    %v342 = vmul.f32 %v339, %v341
    %v343 = vadd.f32 %v339, %v342
    %vm344 = vweird.f32 %v338
    %vm345 = vweird.f32 %v339
    %vm346 = vmor %vm344, %vm345
    %v347 = vsel %vm346, %v339, %v343
    %v348 = vand.u32 2147483647, %v338
    %vm349 = vcmp.eq.f32.partialorder %v348, 8.507059e+37
    %v350 = vand.u32 %v338, 2147483648
    %v351 = vor.u32 1.1754944e-38, %v350
    %v352 = vsel %vm349, %v351, %v347
    %v353 = vmul.f32 1.0, %v352
    %355 = vrot.lane.b32.xlu0 %v332, 64
    %v356 = vpop.permute.xlu0 %355
    %v358 = vmul.f32 %v353, %v356
    %360 = vrot.lane.b32.xlu0 %v358, 64
    %v361 = vpop.permute.xlu0 %360
    %v363 = vadd.f32 %v96, %v361
    %v364 = vtanh.pop %v363
    %v365 = vsub.f32 1.0, %v353
    %367 = vrot.lane.b32.xlu0 %v364, 96
    %v368 = vpop.permute.xlu0 %367
    %v370 = vmul.f32 %v365, %v368
    %v371 = vmul.f32 %v353, %v308
    %v372 = vadd.f32 %v370, %v371
    %374 = vrot.lane.b32.xlu0 %v372, 96
    %v375 = vpop.permute.xlu0 %374
    %v376 = vsel %vm118, %v375, 0
    %378 = vmatpush.msra.mxu0 0.0
    %379 = vmatpush.msra.mxu0 0.0
    %380 = vmatpush.msra.mxu0 0.0
    %381 = vmatpush.msra.mxu0 0.0
    %382 = vmatpush.msra.mxu0 0.0
    %383 = vmatpush.msra.mxu0 0.0
    %384 = vmatpush.msra.mxu0 0.0
    %385 = vmatpush.msra.mxu0 0.0
    %386 = vmatpush.msra.mxu0 0.0
    %387 = vmatpush.msra.mxu0 0.0
    %388 = vmatpush.msra.mxu0 0.0
    %389 = vmatpush.msra.mxu0 0.0
    %390 = vmatpush.msra.mxu0 %v113
    %391 = vmatpush.msra.mxu0 %v112
    %392 = vmatpush.msra.mxu0 %v111
    %393 = vmatpush.msra.mxu0 %v110
    %394 = vmatmul.f32.gmra.mxu0 %v376
    %v395 = vpop.f32.mrf.mxu0
    %v396 = vadd.f32 %v116, %v395
    %397 = vdwg.mxu0
    %v398 = vadd.f32 %v99, %v396
    %v399 = vxor.u32 %v398, 2147483648
    %v400 = vmul.f32 %v399, 1.442695
    %v401 = vpow.pop %v400
    %v402 = vadd.f32 %v401, 1.0
    %v403 = vrcp.pop %v402
    %v404 = vmul.f32 %v402, %v403
    %v405 = vsub.f32 1.0, %v404
    %v406 = vmul.f32 %v403, %v405
    %v407 = vadd.f32 %v403, %v406
    %vm408 = vweird.f32 %v402
    %vm409 = vweird.f32 %v403
    %vm410 = vmor %vm408, %vm409
    %v411 = vsel %vm410, %v403, %v407
    %v412 = vand.u32 2147483647, %v402
    %vm413 = vcmp.eq.f32.partialorder %v412, 8.507059e+37
    %v414 = vand.u32 %v402, 2147483648
    %v415 = vor.u32 1.1754944e-38, %v414
    %v416 = vsel %vm413, %v415, %v411
    %v417 = vmul.f32 1.0, %v416
    %419 = vrot.lane.b32.xlu0 %v396, 64
    %v420 = vpop.permute.xlu0 %419
    %v422 = vmul.f32 %v417, %v420
    %424 = vrot.lane.b32.xlu0 %v422, 64
    %v425 = vpop.permute.xlu0 %424
    %v427 = vadd.f32 %v99, %v425
    %v428 = vtanh.pop %v427
    %v429 = vsub.f32 1.0, %v417
    %431 = vrot.lane.b32.xlu0 %v428, 96
    %v432 = vpop.permute.xlu0 %431
    %v434 = vmul.f32 %v429, %v432
    %v435 = vmul.f32 %v417, %v372
    %v436 = vadd.f32 %v434, %v435
    %438 = vrot.lane.b32.xlu0 %v436, 96
    %v439 = vpop.permute.xlu0 %438
    %v440 = vsel %vm118, %v439, 0
    %442 = vmatpush.msra.mxu0 0.0
    %443 = vmatpush.msra.mxu0 0.0
    %444 = vmatpush.msra.mxu0 0.0
    %445 = vmatpush.msra.mxu0 0.0
    %446 = vmatpush.msra.mxu0 0.0
    %447 = vmatpush.msra.mxu0 0.0
    %448 = vmatpush.msra.mxu0 0.0
    %449 = vmatpush.msra.mxu0 0.0
    %450 = vmatpush.msra.mxu0 0.0
    %451 = vmatpush.msra.mxu0 0.0
    %452 = vmatpush.msra.mxu0 0.0
    %453 = vmatpush.msra.mxu0 0.0
    %454 = vmatpush.msra.mxu0 %v113
    %455 = vmatpush.msra.mxu0 %v112
    %456 = vmatpush.msra.mxu0 %v111
    %457 = vmatpush.msra.mxu0 %v110
    %458 = vmatmul.f32.gmra.mxu0 %v440
    %v459 = vpop.f32.mrf.mxu0
    %v460 = vadd.f32 %v116, %v459
    %461 = vdwg.mxu0
    %v462 = vadd.f32 %v102, %v460
    %v463 = vxor.u32 %v462, 2147483648
    %v464 = vmul.f32 %v463, 1.442695
    %v465 = vpow.pop %v464
    %v466 = vadd.f32 %v465, 1.0
    %v467 = vrcp.pop %v466
    %v468 = vmul.f32 %v466, %v467
    %v469 = vsub.f32 1.0, %v468
    %v470 = vmul.f32 %v467, %v469
    %v471 = vadd.f32 %v467, %v470
    %vm472 = vweird.f32 %v466
    %vm473 = vweird.f32 %v467
    %vm474 = vmor %vm472, %vm473
    %v475 = vsel %vm474, %v467, %v471
    %v476 = vand.u32 2147483647, %v466
    %vm477 = vcmp.eq.f32.partialorder %v476, 8.507059e+37
    %v478 = vand.u32 %v466, 2147483648
    %v479 = vor.u32 1.1754944e-38, %v478
    %v480 = vsel %vm477, %v479, %v475
    %v481 = vmul.f32 1.0, %v480
    %483 = vrot.lane.b32.xlu0 %v460, 64
    %v484 = vpop.permute.xlu0 %483
    %v486 = vmul.f32 %v481, %v484
    %488 = vrot.lane.b32.xlu0 %v486, 64
    %v489 = vpop.permute.xlu0 %488
    %v491 = vadd.f32 %v102, %v489
    %v492 = vtanh.pop %v491
    %v493 = vsub.f32 1.0, %v481
    %495 = vrot.lane.b32.xlu0 %v492, 96
    %v496 = vpop.permute.xlu0 %495
    %v498 = vmul.f32 %v493, %v496
    %v499 = vmul.f32 %v481, %v436
    %v500 = vadd.f32 %v498, %v499
    %502 = vrot.lane.b32.xlu0 %v500, 96
    %v503 = vpop.permute.xlu0 %502
    %v504 = vsel %vm118, %v503, 0
    %506 = vmatpush.msra.mxu0 0.0
    %507 = vmatpush.msra.mxu0 0.0
    %508 = vmatpush.msra.mxu0 0.0
    %509 = vmatpush.msra.mxu0 0.0
    %510 = vmatpush.msra.mxu0 0.0
    %511 = vmatpush.msra.mxu0 0.0
    %512 = vmatpush.msra.mxu0 0.0
    %513 = vmatpush.msra.mxu0 0.0
    %514 = vmatpush.msra.mxu0 0.0
    %515 = vmatpush.msra.mxu0 0.0
    %516 = vmatpush.msra.mxu0 0.0
    %517 = vmatpush.msra.mxu0 0.0
    %518 = vmatpush.msra.mxu0 %v113
    %519 = vmatpush.msra.mxu0 %v112
    %520 = vmatpush.msra.mxu0 %v111
    %521 = vmatpush.msra.mxu0 %v110
    %522 = vmatmul.f32.gmra.mxu0 %v504
    %v523 = vpop.f32.mrf.mxu0
    %v524 = vadd.f32 %v116, %v523
    %525 = vdwg.mxu0
    %v526 = vadd.f32 %v105, %v524
    %v527 = vxor.u32 %v526, 2147483648
    %v528 = vmul.f32 %v527, 1.442695
    %v529 = vpow.pop %v528
    %v530 = vadd.f32 %v529, 1.0
    %v531 = vrcp.pop %v530
    %v532 = vmul.f32 %v530, %v531
    %v533 = vsub.f32 1.0, %v532
    %v534 = vmul.f32 %v531, %v533
    %v535 = vadd.f32 %v531, %v534
    %vm536 = vweird.f32 %v530
    %vm537 = vweird.f32 %v531
    %vm538 = vmor %vm536, %vm537
    %v539 = vsel %vm538, %v531, %v535
    %v540 = vand.u32 2147483647, %v530
    %vm541 = vcmp.eq.f32.partialorder %v540, 8.507059e+37
    %v542 = vand.u32 %v530, 2147483648
    %v543 = vor.u32 1.1754944e-38, %v542
    %v544 = vsel %vm541, %v543, %v539
    %v545 = vmul.f32 1.0, %v544
    %547 = vrot.lane.b32.xlu0 %v524, 64
    %v548 = vpop.permute.xlu0 %547
    %v550 = vmul.f32 %v545, %v548
    %552 = vrot.lane.b32.xlu0 %v550, 64
    %v553 = vpop.permute.xlu0 %552
    %v555 = vadd.f32 %v105, %v553
    %v556 = vtanh.pop %v555
    %v557 = vsub.f32 1.0, %v545
    %559 = vrot.lane.b32.xlu0 %v556, 96
    %v560 = vpop.permute.xlu0 %559
    %v562 = vmul.f32 %v557, %v560
    %v563 = vmul.f32 %v545, %v500
    %v564 = vadd.f32 %v562, %v563
    %566 = vrot.lane.b32.xlu0 %v564, 96
    %v567 = vpop.permute.xlu0 %566
    %v568 = vsel %vm118, %v567, 0
    %570 = vmatpush.msra.mxu0 0.0
    %571 = vmatpush.msra.mxu0 0.0
    %572 = vmatpush.msra.mxu0 0.0
    %573 = vmatpush.msra.mxu0 0.0
    %574 = vmatpush.msra.mxu0 0.0
    %575 = vmatpush.msra.mxu0 0.0
    %576 = vmatpush.msra.mxu0 0.0
    %577 = vmatpush.msra.mxu0 0.0
    %578 = vmatpush.msra.mxu0 0.0
    %579 = vmatpush.msra.mxu0 0.0
    %580 = vmatpush.msra.mxu0 0.0
    %581 = vmatpush.msra.mxu0 0.0
    %582 = vmatpush.msra.mxu0 %v113
    %583 = vmatpush.msra.mxu0 %v112
    %584 = vmatpush.msra.mxu0 %v111
    %585 = vmatpush.msra.mxu0 %v110
    %586 = vmatmul.f32.gmra.mxu0 %v568
    %v587 = vpop.f32.mrf.mxu0
    %v588 = vadd.f32 %v116, %v587
    %589 = vdwg.mxu0
    %v590 = vadd.f32 %v108, %v588
    %v591 = vxor.u32 %v590, 2147483648
    %v592 = vmul.f32 %v591, 1.442695
    %v593 = vpow.pop %v592
    %v594 = vadd.f32 %v593, 1.0
    %v595 = vrcp.pop %v594
    %v596 = vmul.f32 %v594, %v595
    %v597 = vsub.f32 1.0, %v596
    %v598 = vmul.f32 %v595, %v597
    %v599 = vadd.f32 %v595, %v598
    %vm600 = vweird.f32 %v594
    %vm601 = vweird.f32 %v595
    %vm602 = vmor %vm600, %vm601
    %v603 = vsel %vm602, %v595, %v599
    %v604 = vand.u32 2147483647, %v594
    %vm605 = vcmp.eq.f32.partialorder %v604, 8.507059e+37
    %v606 = vand.u32 %v594, 2147483648
    %v607 = vor.u32 1.1754944e-38, %v606
    %v608 = vsel %vm605, %v607, %v603
    %v609 = vmul.f32 1.0, %v608
    %611 = vrot.lane.b32.xlu0 %v588, 64
    %v612 = vpop.permute.xlu0 %611
    %v614 = vmul.f32 %v609, %v612
    %616 = vrot.lane.b32.xlu0 %v614, 64
    %v617 = vpop.permute.xlu0 %616
    %v619 = vadd.f32 %v108, %v617
    %v620 = vtanh.pop %v619
    %v621 = vsub.f32 1.0, %v609
    %623 = vrot.lane.b32.xlu0 %v620, 96
    %v624 = vpop.permute.xlu0 %623
    %v626 = vmul.f32 %v621, %v624
    %v627 = vmul.f32 %v609, %v564
    %v628 = vadd.f32 %v626, %v627
    %v629 = vld [vmem:[%s5] sm:$0xff]
    %v630 = vld [vmem:[%s5 + $0x8] sm:$0xff]
    %v631 = vld [vmem:[%s5 + $0x10] sm:$0xff]
    %v632 = vld [vmem:[%s5 + $0x18] sm:$0xff]
    %v633 = vld [vmem:[%s6] sm:$0x1]
    %v635 = vperm.slane %v633, 0
    %638 = vrot.lane.b32.xlu0 %v628, 96
    %v639 = vpop.permute.xlu0 %638
    %v640 = vsel %vm118, %v639, 0
    %642 = vmatpush.msra.mxu0 0.0
    %643 = vmatpush.msra.mxu0 0.0
    %644 = vmatpush.msra.mxu0 0.0
    %645 = vmatpush.msra.mxu0 0.0
    %646 = vmatpush.msra.mxu0 0.0
    %647 = vmatpush.msra.mxu0 0.0
    %648 = vmatpush.msra.mxu0 0.0
    %649 = vmatpush.msra.mxu0 0.0
    %650 = vmatpush.msra.mxu0 0.0
    %651 = vmatpush.msra.mxu0 0.0
    %652 = vmatpush.msra.mxu0 0.0
    %653 = vmatpush.msra.mxu0 0.0
    %654 = vmatpush.msra.mxu0 %v632
    %655 = vmatpush.msra.mxu0 %v631
    %656 = vmatpush.msra.mxu0 %v630
    %657 = vmatpush.msra.mxu0 %v629
    %658 = vmatmul.f32.gmra.mxu0 %v640
    %v659 = vpop.f32.mrf.mxu0
    %v660 = vadd.f32 %v635, %v659
    %661 = vdwg.mxu0
    %vm662 = vcmask 48128
    %663 = vst.msk [vmem:[#allocation2] sm:$0xff] %vm662, %v660
    // Predicated region
    $region30: #{tpu_custom_call.1} parent=1 // pred_check
      _
    $region31: #{tpu_custom_call.1} parent=1 // pred_check_branch
      %665 = sbr.rel (0) target = $region33
    $region32: #{tpu_custom_call.1} parent=1 // pred_region
      %667 = vsyncadd [#allocation3], 0
      %s669 = sshll.u32 [#allocation2], 4
      %s670 = int_to_ptr.vmem [resolvable:$true] %s669
      %s671 = sshll.u32 %s7, 4
      %s672 = int_to_ptr.hbm [resolvable:$true] %s671
      %674 = dma.vmem_to_hbm [thread:$0]  %s670, 128, %s672, [#allocation3]
    $region33: #{tpu_custom_call.1} parent=1 // pred_fallthru
      _
    // Predicated region
    $region34: #{tpu_custom_call.1} parent=1 // pred_check
      _
    $region35: #{tpu_custom_call.1} parent=1 // pred_check_branch
      %676 = sbr.rel (0) target = $region37
    $region36: #{tpu_custom_call.1} parent=1 // pred_region
      %678 = dma.done [#allocation3], 128
    $region37: #{tpu_custom_call.1} parent=1 // pred_fallthru
      _
    %679 = vsyncpa [#allocation3], 1

</llo_original>
